<compile_context>
chip_gen: v5e
topology: v5e:2x2
jax: 0.10.0
libtpu: 0.0.40
codegen_flags: <defaults>
</compile_context>

<pallas_src>
import jax
import jax.numpy as jnp
from jax.experimental import pallas as pl
from jax.experimental.pallas import tpu as pltpu

HID = 259        # original hidden width (fcs1 / fc2 / fc3 units)
HID_PAD = 384    # 3 x 128 lanes, zero padded
IN_PAD = 128     # [state | action | zeros] packed into one lane group
OUT_LANES = 128  # lane-dense output slab; real Q value lives in column 0


def _round_up(x, m):
    return (x + m - 1) // m * m


def critic_kernel(sa_ref, w1_ref, b1_ref,
                  w2s_ref, w2a_ref, b2_ref,
                  w3_ref, b3_ref,
                  w4_ref, b4_ref,
                  out_ref):
    sa = sa_ref[...]                                             # (TB, 128)

    # fcs1 + relu   (padded input rows beyond state_size are zero in w1)
    xs = jnp.maximum(
        jnp.dot(sa, w1_ref[...], preferred_element_type=jnp.float32)
        + b1_ref[...], 0.0)

    # fc2 on cat(xs, action) + relu, concat folded into two lane-dense matmuls
    x = jnp.maximum(
        jnp.dot(xs, w2s_ref[...], preferred_element_type=jnp.float32)
        + jnp.dot(sa, w2a_ref[...], preferred_element_type=jnp.float32)
        + b2_ref[...], 0.0)

    # fc3 + relu
    x = jnp.maximum(
        jnp.dot(x, w3_ref[...], preferred_element_type=jnp.float32)
        + b3_ref[...], 0.0)

    # fc4 -> Q: VPU multiply + lane reduce (avoids an N=1 MXU pass and masked
    # stores); padded lanes of w4 row are zero so the reduction is exact.
    q = jnp.sum(x * w4_ref[...], axis=-1, keepdims=True)         # (TB, 1)
    out_ref[...] = (jnp.broadcast_to(q, out_ref.shape)
                    + b4_ref[...]).astype(out_ref.dtype)


def critic_forward(state, action, padded_params, *, max_tile=512):
    """state: (B, S) f32, action: (B, A) f32 -> (B, 1) f32 Q-values."""
    B, sdim = state.shape
    adim = action.shape[1]
    (w1p, b1p, w2sp, w2ap, b2p, w3p, b3p, w4row, b4row) = padded_params
    KP, HP = w1p.shape

    # Pack [state | action | zeros] into one lane-dense (B, KP) operand.
    sa = jnp.zeros((B, KP), jnp.float32)
    sa = sa.at[:, :sdim].set(state.astype(jnp.float32))
    sa = sa.at[:, sdim:sdim + adim].set(action.astype(jnp.float32))

    # Row-tile the batch; pad rows so the tile divides evenly. Padded rows are
    # inert and sliced off below. max_tile=512 keeps the working set well
    # inside v7x's 64 MiB VMEM while amortizing the per-step overhead.
    TB = min(max_tile, _round_up(B, 8))
    Bp = _round_up(B, TB)
    if Bp != B:
        sa = jnp.pad(sa, ((0, Bp - B), (0, 0)))
    grid = (Bp // TB,)

    flops = 2 * Bp * (KP * HP + HP * HP + KP * HP + HP * HP + HP)
    bytes_accessed = 4 * (2 * KP * HP + 2 * HP * HP + 4 * HP + OUT_LANES
                          + Bp * (KP + OUT_LANES))

    out = pl.pallas_call(
        critic_kernel,
        out_shape=jax.ShapeDtypeStruct((Bp, OUT_LANES), jnp.float32),
        grid=grid,
        in_specs=[
            pl.BlockSpec((TB, KP), lambda i: (i, 0)),        # [state|action] rows
            pl.BlockSpec((KP, HP), lambda i: (0, 0)),        # w1  (VMEM-resident)
            pl.BlockSpec((1, HP), lambda i: (0, 0)),         # b1
            pl.BlockSpec((HP, HP), lambda i: (0, 0)),        # w2 (xs block)
            pl.BlockSpec((KP, HP), lambda i: (0, 0)),        # w2 (action block)
            pl.BlockSpec((1, HP), lambda i: (0, 0)),         # b2
            pl.BlockSpec((HP, HP), lambda i: (0, 0)),        # w3
            pl.BlockSpec((1, HP), lambda i: (0, 0)),         # b3
            pl.BlockSpec((1, HP), lambda i: (0, 0)),         # w4 row
            pl.BlockSpec((1, OUT_LANES), lambda i: (0, 0)),  # b4 broadcast row
        ],
        out_specs=pl.BlockSpec((TB, OUT_LANES), lambda i: (i, 0)),
        compiler_params=pltpu.CompilerParams(
            dimension_semantics=("parallel",)),
        cost_estimate=pl.CostEstimate(
            flops=flops, transcendentals=0, bytes_accessed=bytes_accessed),
    )(sa, w1p, b1p, w2sp, w2ap, b2p, w3p, b3p, w4row, b4row)

    return out[:B, :1]


def init_params(key, state_size, action_size,
                fcs1_units=HID, fc2_units=HID, fc3_units=HID):
    """Deterministic synthetic init mirroring the module's layer shapes.
    Weights stored as (in, out); biases as (1, out)."""
    ks = jax.random.split(key, 8)

    def uni(k, shape, lim):
        return jax.random.uniform(k, shape, jnp.float32, minval=-lim, maxval=lim)

    lim1 = 1.0 / jnp.sqrt(float(fcs1_units))
    lim2 = 1.0 / jnp.sqrt(float(fc2_units))
    lim3 = 1.0 / jnp.sqrt(float(fc3_units))

    w1 = uni(ks[0], (state_size, fcs1_units), lim1)
    b1 = uni(ks[1], (1, fcs1_units), lim1)
    w2 = uni(ks[2], (fcs1_units + action_size, fc2_units), lim2)
    w2s = w2[:fcs1_units, :]
    w2a = w2[fcs1_units:, :]
    b2 = uni(ks[3], (1, fc2_units), lim2)
    w3 = uni(ks[4], (fc2_units, fc3_units), lim3)
    b3 = uni(ks[5], (1, fc3_units), lim3)
    w4 = uni(ks[6], (fc3_units, 1), 3e-3)
    b4 = uni(ks[7], (1, 1), 3e-3)
    return (w1, b1, w2s, w2a, b2, w3, b3, w4, b4)


def pad_params(params, state_size, action_size,
               hid=HID, hid_pad=HID_PAD, in_pad=IN_PAD):
    """Zero-pad weights/biases to lane-aligned shapes. Padded rows/cols are
    zero so padded lanes stay inert through every ReLU and the final layer."""
    (w1, b1, w2s, w2a, b2, w3, b3, w4, b4) = params
    w1p = jnp.zeros((in_pad, hid_pad), jnp.float32).at[:state_size, :hid].set(w1)
    b1p = jnp.zeros((1, hid_pad), jnp.float32).at[:, :hid].set(b1)
    w2sp = jnp.zeros((hid_pad, hid_pad), jnp.float32).at[:hid, :hid].set(w2s)
    w2ap = jnp.zeros((in_pad, hid_pad), jnp.float32).at[
        state_size:state_size + action_size, :hid].set(w2a)
    b2p = jnp.zeros((1, hid_pad), jnp.float32).at[:, :hid].set(b2)
    w3p = jnp.zeros((hid_pad, hid_pad), jnp.float32).at[:hid, :hid].set(w3)
    b3p = jnp.zeros((1, hid_pad), jnp.float32).at[:, :hid].set(b3)
    w4row = jnp.zeros((1, hid_pad), jnp.float32).at[:, :hid].set(w4.T)
    b4row = jnp.broadcast_to(b4.reshape(1, 1), (1, OUT_LANES)).astype(jnp.float32)
    return (w1p, b1p, w2sp, w2ap, b2p, w3p, b3p, w4row, b4row)


def critic_ref(state, action, params):
    """Pure-JAX reference (unpadded) for correctness checks."""
    (w1, b1, w2s, w2a, b2, w3, b3, w4, b4) = params
    xs = jnp.maximum(state @ w1 + b1, 0.0)
    x = jnp.maximum(xs @ w2s + action @ w2a + b2, 0.0)
    x = jnp.maximum(x @ w3 + b3, 0.0)
    return x @ w4 + b4


if __name__ == "__main__":
    # Pendulum-like sizes: state dim 3, action dim 1, small batch.
    batch, state_size, action_size = 8, 3, 1

    key = jax.random.PRNGKey(0)
    k_state, k_action, k_params = jax.random.split(key, 3)
    state = jax.random.normal(k_state, (batch, state_size), jnp.float32)
    action = jax.random.uniform(k_action, (batch, action_size), jnp.float32,
                                minval=-1.0, maxval=1.0)
    params = init_params(k_params, state_size, action_size)
    padded = pad_params(params, state_size, action_size)

    q = jax.block_until_ready(critic_forward(state, action, padded))
    q_ref = critic_ref(state, action, params)
    assert q.shape == (batch, 1)
    assert jnp.allclose(q, q_ref, atol=1e-4, rtol=1e-4), "mismatch vs reference"

    # Exercise the batch grid (multiple row tiles + batch-row padding).
    B2 = 40
    s2 = jax.random.normal(jax.random.PRNGKey(1), (B2, state_size), jnp.float32)
    a2 = jax.random.uniform(jax.random.PRNGKey(2), (B2, action_size),
                            jnp.float32, minval=-1.0, maxval=1.0)
    q2 = jax.block_until_ready(critic_forward(s2, a2, padded, max_tile=16))
    q2_ref = critic_ref(s2, a2, params)
    assert q2.shape == (B2, 1)
    assert jnp.allclose(q2, q2_ref, atol=1e-4, rtol=1e-4), "grid mismatch vs reference"

    print("KERNEL_OK")
</pallas_src>

<mosaic_0001>
module attributes {stable_mosaic.version = 11 : i64} {
  func.func @critic_kernel(%arg0: i32, %arg1: memref<8x128xf32, #tpu.memory_space<vmem>>, %arg2: memref<128x384xf32, #tpu.memory_space<vmem>>, %arg3: memref<1x384xf32, #tpu.memory_space<vmem>>, %arg4: memref<384x384xf32, #tpu.memory_space<vmem>>, %arg5: memref<128x384xf32, #tpu.memory_space<vmem>>, %arg6: memref<1x384xf32, #tpu.memory_space<vmem>>, %arg7: memref<384x384xf32, #tpu.memory_space<vmem>>, %arg8: memref<1x384xf32, #tpu.memory_space<vmem>>, %arg9: memref<1x384xf32, #tpu.memory_space<vmem>>, %arg10: memref<1x128xf32, #tpu.memory_space<vmem>>, %arg11: memref<8x128xf32, #tpu.memory_space<vmem>>) attributes {dimension_semantics = [#tpu.dimension_semantics<parallel>], iteration_bounds = array<i64: 1>, scalar_prefetch = 0 : i64, scratch_operands = 0 : i64, tpu.core_type = #tpu.core_type<tc>, window_params = [{transform_indices = @transform_0, window_bounds = array<i64: 8, 128>}, {pipeline_mode = #tpu.pipeline_mode<synchronous>, transform_indices = @transform_1, window_bounds = array<i64: 128, 384>}, {pipeline_mode = #tpu.pipeline_mode<synchronous>, transform_indices = @transform_2, window_bounds = array<i64: 1, 384>}, {pipeline_mode = #tpu.pipeline_mode<synchronous>, transform_indices = @transform_3, window_bounds = array<i64: 384, 384>}, {pipeline_mode = #tpu.pipeline_mode<synchronous>, transform_indices = @transform_4, window_bounds = array<i64: 128, 384>}, {pipeline_mode = #tpu.pipeline_mode<synchronous>, transform_indices = @transform_5, window_bounds = array<i64: 1, 384>}, {pipeline_mode = #tpu.pipeline_mode<synchronous>, transform_indices = @transform_6, window_bounds = array<i64: 384, 384>}, {pipeline_mode = #tpu.pipeline_mode<synchronous>, transform_indices = @transform_7, window_bounds = array<i64: 1, 384>}, {pipeline_mode = #tpu.pipeline_mode<synchronous>, transform_indices = @transform_8, window_bounds = array<i64: 1, 384>}, {pipeline_mode = #tpu.pipeline_mode<synchronous>, transform_indices = @transform_9, window_bounds = array<i64: 1, 128>}, {transform_indices = @transform_10, window_bounds = array<i64: 8, 128>}]} {
    %c0 = arith.constant 0 : index
    %c0_0 = arith.constant 0 : index
    %0 = vector.load %arg1[%c0, %c0_0] : memref<8x128xf32, #tpu.memory_space<vmem>>, vector<8x128xf32>
    %c0_1 = arith.constant 0 : index
    %c0_2 = arith.constant 0 : index
    %1 = vector.load %arg2[%c0_1, %c0_2] : memref<128x384xf32, #tpu.memory_space<vmem>>, vector<128x384xf32>
    %cst = arith.constant dense<0.000000e+00> : vector<8x384xf32>
    %2 = tpu.matmul %0, %1, %cst {dimension_numbers = #tpu.dot_dimension_numbers<[1], [0], [0], [1], [0, 0, 1, 1], [], []>} : vector<8x128xf32>, vector<128x384xf32>, vector<8x384xf32> -> vector<8x384xf32>
    %c0_3 = arith.constant 0 : index
    %c0_4 = arith.constant 0 : index
    %3 = vector.load %arg3[%c0_3, %c0_4] : memref<1x384xf32, #tpu.memory_space<vmem>>, vector<1x384xf32>
    %4 = vector.broadcast %3 : vector<1x384xf32> to vector<8x384xf32>
    %5 = arith.addf %2, %4 : vector<8x384xf32>
    %cst_5 = arith.constant 0.000000e+00 : f32
    %6 = vector.broadcast %cst_5 : f32 to vector<8x384xf32>
    %7 = arith.maximumf %5, %6 : vector<8x384xf32>
    %c0_6 = arith.constant 0 : index
    %c0_7 = arith.constant 0 : index
    %8 = vector.load %arg4[%c0_6, %c0_7] : memref<384x384xf32, #tpu.memory_space<vmem>>, vector<384x384xf32>
    %cst_8 = arith.constant dense<0.000000e+00> : vector<8x384xf32>
    %9 = tpu.matmul %7, %8, %cst_8 {dimension_numbers = #tpu.dot_dimension_numbers<[1], [0], [0], [1], [0, 0, 1, 1], [], []>} : vector<8x384xf32>, vector<384x384xf32>, vector<8x384xf32> -> vector<8x384xf32>
    %c0_9 = arith.constant 0 : index
    %c0_10 = arith.constant 0 : index
    %10 = vector.load %arg5[%c0_9, %c0_10] : memref<128x384xf32, #tpu.memory_space<vmem>>, vector<128x384xf32>
    %cst_11 = arith.constant dense<0.000000e+00> : vector<8x384xf32>
    %11 = tpu.matmul %0, %10, %cst_11 {dimension_numbers = #tpu.dot_dimension_numbers<[1], [0], [0], [1], [0, 0, 1, 1], [], []>} : vector<8x128xf32>, vector<128x384xf32>, vector<8x384xf32> -> vector<8x384xf32>
    %12 = arith.addf %9, %11 : vector<8x384xf32>
    %c0_12 = arith.constant 0 : index
    %c0_13 = arith.constant 0 : index
    %13 = vector.load %arg6[%c0_12, %c0_13] : memref<1x384xf32, #tpu.memory_space<vmem>>, vector<1x384xf32>
    %14 = vector.broadcast %13 : vector<1x384xf32> to vector<8x384xf32>
    %15 = arith.addf %12, %14 : vector<8x384xf32>
    %cst_14 = arith.constant 0.000000e+00 : f32
    %16 = vector.broadcast %cst_14 : f32 to vector<8x384xf32>
    %17 = arith.maximumf %15, %16 : vector<8x384xf32>
    %c0_15 = arith.constant 0 : index
    %c0_16 = arith.constant 0 : index
    %18 = vector.load %arg7[%c0_15, %c0_16] : memref<384x384xf32, #tpu.memory_space<vmem>>, vector<384x384xf32>
    %cst_17 = arith.constant dense<0.000000e+00> : vector<8x384xf32>
    %19 = tpu.matmul %17, %18, %cst_17 {dimension_numbers = #tpu.dot_dimension_numbers<[1], [0], [0], [1], [0, 0, 1, 1], [], []>} : vector<8x384xf32>, vector<384x384xf32>, vector<8x384xf32> -> vector<8x384xf32>
    %c0_18 = arith.constant 0 : index
    %c0_19 = arith.constant 0 : index
    %20 = vector.load %arg8[%c0_18, %c0_19] : memref<1x384xf32, #tpu.memory_space<vmem>>, vector<1x384xf32>
    %21 = vector.broadcast %20 : vector<1x384xf32> to vector<8x384xf32>
    %22 = arith.addf %19, %21 : vector<8x384xf32>
    %cst_20 = arith.constant 0.000000e+00 : f32
    %23 = vector.broadcast %cst_20 : f32 to vector<8x384xf32>
    %24 = arith.maximumf %22, %23 : vector<8x384xf32>
    %c0_21 = arith.constant 0 : index
    %c0_22 = arith.constant 0 : index
    %25 = vector.load %arg9[%c0_21, %c0_22] : memref<1x384xf32, #tpu.memory_space<vmem>>, vector<1x384xf32>
    %26 = vector.broadcast %25 : vector<1x384xf32> to vector<8x384xf32>
    %27 = arith.mulf %24, %26 : vector<8x384xf32>
    %cst_23 = arith.constant dense<0.000000e+00> : vector<8xf32>
    %28 = vector.multi_reduction <add>, %27, %cst_23 [1] : vector<8x384xf32> to vector<8xf32>
    %29 = vector.shape_cast %28 : vector<8xf32> to vector<8x1xf32>
    %30 = vector.shape_cast %29 : vector<8x1xf32> to vector<8x1xf32>
    %31 = vector.broadcast %30 : vector<8x1xf32> to vector<8x128xf32>
    %c0_24 = arith.constant 0 : index
    %c0_25 = arith.constant 0 : index
    %32 = vector.load %arg10[%c0_24, %c0_25] : memref<1x128xf32, #tpu.memory_space<vmem>>, vector<1x128xf32>
    %33 = vector.broadcast %32 : vector<1x128xf32> to vector<8x128xf32>
    %34 = arith.addf %31, %33 : vector<8x128xf32>
    %c0_26 = arith.constant 0 : index
    %c0_27 = arith.constant 0 : index
    %35 = vector.load %arg11[%c0_26, %c0_27] : memref<8x128xf32, #tpu.memory_space<vmem>>, vector<8x128xf32>
    tpu.vector_store %arg11[%c0_26, %c0_27], %34 {strides = array<i32>} : memref<8x128xf32, #tpu.memory_space<vmem>>, vector<8x128xf32>,
    return
  }
  func.func @transform_0(%arg0: i32) -> (i32, i32) {
    %c0_i32 = arith.constant 0 : i32
    %c0_i32_0 = arith.constant 0 : i32
    return %arg0, %c0_i32 : i32, i32
  }
  func.func @transform_1(%arg0: i32) -> (i32, i32) {
    %c0_i32 = arith.constant 0 : i32
    %c0_i32_0 = arith.constant 0 : i32
    %c0_i32_1 = arith.constant 0 : i32
    return %c0_i32, %c0_i32_0 : i32, i32
  }
  func.func @transform_2(%arg0: i32) -> (i32, i32) {
    %c0_i32 = arith.constant 0 : i32
    %c0_i32_0 = arith.constant 0 : i32
    %c0_i32_1 = arith.constant 0 : i32
    return %c0_i32, %c0_i32_0 : i32, i32
  }
  func.func @transform_3(%arg0: i32) -> (i32, i32) {
    %c0_i32 = arith.constant 0 : i32
    %c0_i32_0 = arith.constant 0 : i32
    %c0_i32_1 = arith.constant 0 : i32
    return %c0_i32, %c0_i32_0 : i32, i32
  }
  func.func @transform_4(%arg0: i32) -> (i32, i32) {
    %c0_i32 = arith.constant 0 : i32
    %c0_i32_0 = arith.constant 0 : i32
    %c0_i32_1 = arith.constant 0 : i32
    return %c0_i32, %c0_i32_0 : i32, i32
  }
  func.func @transform_5(%arg0: i32) -> (i32, i32) {
    %c0_i32 = arith.constant 0 : i32
    %c0_i32_0 = arith.constant 0 : i32
    %c0_i32_1 = arith.constant 0 : i32
    return %c0_i32, %c0_i32_0 : i32, i32
  }
  func.func @transform_6(%arg0: i32) -> (i32, i32) {
    %c0_i32 = arith.constant 0 : i32
    %c0_i32_0 = arith.constant 0 : i32
    %c0_i32_1 = arith.constant 0 : i32
    return %c0_i32, %c0_i32_0 : i32, i32
  }
  func.func @transform_7(%arg0: i32) -> (i32, i32) {
    %c0_i32 = arith.constant 0 : i32
    %c0_i32_0 = arith.constant 0 : i32
    %c0_i32_1 = arith.constant 0 : i32
    return %c0_i32, %c0_i32_0 : i32, i32
  }
  func.func @transform_8(%arg0: i32) -> (i32, i32) {
    %c0_i32 = arith.constant 0 : i32
    %c0_i32_0 = arith.constant 0 : i32
    %c0_i32_1 = arith.constant 0 : i32
    return %c0_i32, %c0_i32_0 : i32, i32
  }
  func.func @transform_9(%arg0: i32) -> (i32, i32) {
    %c0_i32 = arith.constant 0 : i32
    %c0_i32_0 = arith.constant 0 : i32
    %c0_i32_1 = arith.constant 0 : i32
    return %c0_i32, %c0_i32_0 : i32, i32
  }
  func.func @transform_10(%arg0: i32) -> (i32, i32) {
    %c0_i32 = arith.constant 0 : i32
    %c0_i32_0 = arith.constant 0 : i32
    return %arg0, %c0_i32 : i32, i32
  }
}

</mosaic_0001>

<llo_original>
// kernel: tpu_custom_call.1
$region0: #{tpu_custom_call.1}
  #allocation0 [shape = 'u32[]', space=smem, size = 0x4, offset = 0x4, fixed_abs, tag = 'smem constant byte address 0x4 - core index']
  #allocation1 [shape = 'u32[72,128]{1,0:T(1,128)}', space=vmem, size = 0x9000, scoped, tag = 'internal scratch']
  %s0 = inlined_call_operand.hbm [shape: f32[8,128], index: 0, kind: input, shape index: {}]
  %s1 = inlined_call_operand.hbm [shape: f32[128,384], index: 1, kind: input, shape index: {}]
  %s2 = inlined_call_operand.hbm [shape: f32[1,384], index: 2, kind: input, shape index: {}]
  %s3 = inlined_call_operand.hbm [shape: f32[384,384], index: 3, kind: input, shape index: {}]
  %s4 = inlined_call_operand.hbm [shape: f32[128,384], index: 4, kind: input, shape index: {}]
  %s5 = inlined_call_operand.vmem [shape: f32[1,384], index: 5, kind: input, shape index: {}]
  %s6 = inlined_call_operand.hbm [shape: f32[384,384], index: 6, kind: input, shape index: {}]
  %s7 = inlined_call_operand.vmem [shape: f32[1,384], index: 7, kind: input, shape index: {}]
  %s8 = inlined_call_operand.hbm [shape: f32[1,384], index: 8, kind: input, shape index: {}]
  %s9 = inlined_call_operand.vmem [shape: f32[1,128], index: 9, kind: input, shape index: {}]
  %s10 = inlined_call_operand.hbm [shape: f32[8,128], index: 10, kind: output, shape index: {}]
  %s11 = sld [smem:[#allocation0]]
  $region78: #{tpu_custom_call.1} parent=0
    _
  %s13 = ssub.s32 1, %s11
  %s14 = scalar_select 0, %s13, %s11
  $region1: #{tpu_custom_call.1} parent=0
    #allocation2 [shape = 'u8[4096]{0}', space=vmem, size = 0x1000, scoped, tag = 'input window, operand 0, single buffered']
    #allocation3 [shape = 's32[1]{0}', space=sflag, size = 0x4, scoped, tag = 'scoped memory for tpu_custom_call.1']
    #allocation4 [shape = 's32[1]{0}', space=sflag, size = 0x4, scoped, tag = 'scoped memory for tpu_custom_call.1']
    #allocation5 [shape = 'u8[196608]{0}', space=vmem, size = 0x30000, scoped, tag = 'input window, operand 1, single buffered']
    #allocation6 [shape = 's32[1]{0}', space=sflag, size = 0x4, scoped, tag = 'scoped memory for tpu_custom_call.1']
    #allocation7 [shape = 'u8[1536]{0}', space=vmem, size = 0x800, scoped, tag = 'input window, operand 2, single buffered']
    #allocation8 [shape = 'u8[589824]{0}', space=vmem, size = 0x90000, scoped, tag = 'input window, operand 3, single buffered']
    #allocation9 [shape = 's32[1]{0}', space=sflag, size = 0x4, scoped, tag = 'scoped memory for tpu_custom_call.1']
    #allocation10 [shape = 'u8[196608]{0}', space=vmem, size = 0x30000, scoped, tag = 'input window, operand 4, single buffered']
    #allocation11 [shape = 'u8[589824]{0}', space=vmem, size = 0x90000, scoped, tag = 'input window, operand 6, single buffered']
    #allocation12 [shape = 's32[1]{0}', space=sflag, size = 0x4, scoped, tag = 'scoped memory for tpu_custom_call.1']
    #allocation13 [shape = 'u8[1536]{0}', space=vmem, size = 0x800, scoped, tag = 'input window, operand 8, single buffered']
    #allocation14 [shape = 'u8[4096]{0}', space=vmem, size = 0x1000, scoped, tag = 'output window, operand 0, single buffered']
    %15 = vsyncpa [#allocation3], 0
    %16 = vsyncpa [#allocation6], 0
    %17 = vsyncpa [#allocation9], 0
    %18 = vsyncpa [#allocation12], 0
    %19 = vsyncpa [#allocation4], 0
    // Predicated region
    $region2: #{tpu_custom_call.1} parent=1 // pred_check
      _
    $region3: #{tpu_custom_call.1} parent=1 // pred_check_branch
      %21 = sbr.rel (0) target = $region5
    $region4: #{tpu_custom_call.1} parent=1 // pred_region
      %23 = vsyncadd [#allocation3], 0
      %s25 = sshll.u32 %s0, 4
      %s26 = int_to_ptr.hbm [resolvable:$true] %s25
      %s27 = sshll.u32 [#allocation2], 4
      %s28 = int_to_ptr.vmem [resolvable:$true] %s27
      %30 = dma.hbm_to_vmem [thread:$0]  %s26, 128, %s28, [#allocation3]
    $region5: #{tpu_custom_call.1} parent=1 // pred_fallthru
      _
    // Predicated region
    $region6: #{tpu_custom_call.1} parent=1 // pred_check
      _
    $region7: #{tpu_custom_call.1} parent=1 // pred_check_branch
      %32 = sbr.rel (0) target = $region9
    $region8: #{tpu_custom_call.1} parent=1 // pred_region
      %34 = vsyncadd [#allocation6], 0
      %s35 = sshll.u32 %s1, 4
      %s36 = int_to_ptr.hbm [resolvable:$true] %s35
      %s37 = sshll.u32 [#allocation5], 4
      %s38 = int_to_ptr.vmem [resolvable:$true] %s37
      %43 = dma.hbm_to_vmem [thread:$0]  %s36, 6144, %s38, [#allocation6], 384, 384, 24
    $region9: #{tpu_custom_call.1} parent=1 // pred_fallthru
      _
    // Predicated region
    $region10: #{tpu_custom_call.1} parent=1 // pred_check
      _
    $region11: #{tpu_custom_call.1} parent=1 // pred_check_branch
      %45 = sbr.rel (0) target = $region13
    $region12: #{tpu_custom_call.1} parent=1 // pred_region
      %47 = vsyncadd [#allocation6], 0
      %s49 = sshll.u32 %s2, 4
      %s50 = int_to_ptr.hbm [resolvable:$true] %s49
      %s51 = sshll.u32 [#allocation7], 4
      %s52 = int_to_ptr.vmem [resolvable:$true] %s51
      %54 = dma.hbm_to_vmem [thread:$0]  %s50, 48, %s52, [#allocation6]
    $region13: #{tpu_custom_call.1} parent=1 // pred_fallthru
      _
    // Predicated region
    $region14: #{tpu_custom_call.1} parent=1 // pred_check
      _
    $region15: #{tpu_custom_call.1} parent=1 // pred_check_branch
      %56 = sbr.rel (0) target = $region17
    $region16: #{tpu_custom_call.1} parent=1 // pred_region
      %58 = vsyncadd [#allocation9], 0
      %s59 = sshll.u32 %s3, 4
      %s60 = int_to_ptr.hbm [resolvable:$true] %s59
      %s61 = sshll.u32 [#allocation8], 4
      %s62 = int_to_ptr.vmem [resolvable:$true] %s61
      %67 = dma.hbm_to_vmem [thread:$0]  %s60, 18432, %s62, [#allocation9], 384, 384, 24
    $region17: #{tpu_custom_call.1} parent=1 // pred_fallthru
      _
    // Predicated region
    $region18: #{tpu_custom_call.1} parent=1 // pred_check
      _
    $region19: #{tpu_custom_call.1} parent=1 // pred_check_branch
      %69 = sbr.rel (0) target = $region21
    $region20: #{tpu_custom_call.1} parent=1 // pred_region
      %71 = vsyncadd [#allocation9], 0
      %s72 = sshll.u32 %s4, 4
      %s73 = int_to_ptr.hbm [resolvable:$true] %s72
      %s74 = sshll.u32 [#allocation10], 4
      %s75 = int_to_ptr.vmem [resolvable:$true] %s74
      %80 = dma.hbm_to_vmem [thread:$0]  %s73, 6144, %s75, [#allocation9], 384, 384, 24
    $region21: #{tpu_custom_call.1} parent=1 // pred_fallthru
      _
    // Predicated region
    $region22: #{tpu_custom_call.1} parent=1 // pred_check
      _
    $region23: #{tpu_custom_call.1} parent=1 // pred_check_branch
      %82 = sbr.rel (0) target = $region25
    $region24: #{tpu_custom_call.1} parent=1 // pred_region
      _
    $region25: #{tpu_custom_call.1} parent=1 // pred_fallthru
      _
    // Predicated region
    $region26: #{tpu_custom_call.1} parent=1 // pred_check
      _
    $region27: #{tpu_custom_call.1} parent=1 // pred_check_branch
      %84 = sbr.rel (0) target = $region29
    $region28: #{tpu_custom_call.1} parent=1 // pred_region
      %86 = vsyncadd [#allocation12], 0
      %s87 = sshll.u32 %s6, 4
      %s88 = int_to_ptr.hbm [resolvable:$true] %s87
      %s89 = sshll.u32 [#allocation11], 4
      %s90 = int_to_ptr.vmem [resolvable:$true] %s89
      %95 = dma.hbm_to_vmem [thread:$0]  %s88, 18432, %s90, [#allocation12], 384, 384, 24
    $region29: #{tpu_custom_call.1} parent=1 // pred_fallthru
      _
    // Predicated region
    $region30: #{tpu_custom_call.1} parent=1 // pred_check
      _
    $region31: #{tpu_custom_call.1} parent=1 // pred_check_branch
      %97 = sbr.rel (0) target = $region33
    $region32: #{tpu_custom_call.1} parent=1 // pred_region
      _
    $region33: #{tpu_custom_call.1} parent=1 // pred_fallthru
      _
    // Predicated region
    $region34: #{tpu_custom_call.1} parent=1 // pred_check
      _
    $region35: #{tpu_custom_call.1} parent=1 // pred_check_branch
      %99 = sbr.rel (0) target = $region37
    $region36: #{tpu_custom_call.1} parent=1 // pred_region
      %101 = vsyncadd [#allocation12], 0
      %s103 = sshll.u32 %s8, 4
      %s104 = int_to_ptr.hbm [resolvable:$true] %s103
      %s105 = sshll.u32 [#allocation13], 4
      %s106 = int_to_ptr.vmem [resolvable:$true] %s105
      %108 = dma.hbm_to_vmem [thread:$0]  %s104, 48, %s106, [#allocation12]
    $region37: #{tpu_custom_call.1} parent=1 // pred_fallthru
      _
    // Predicated region
    $region38: #{tpu_custom_call.1} parent=1 // pred_check
      _
    $region39: #{tpu_custom_call.1} parent=1 // pred_check_branch
      %110 = sbr.rel (0) target = $region41
    $region40: #{tpu_custom_call.1} parent=1 // pred_region
      _
    $region41: #{tpu_custom_call.1} parent=1 // pred_fallthru
      _
    // Predicated region
    $region42: #{tpu_custom_call.1} parent=1 // pred_check
      _
    $region43: #{tpu_custom_call.1} parent=1 // pred_check_branch
      %112 = sbr.rel (0) target = $region45
    $region44: #{tpu_custom_call.1} parent=1 // pred_region
      %114 = dma.done [#allocation3], 128
    $region45: #{tpu_custom_call.1} parent=1 // pred_fallthru
      _
    // Predicated region
    $region46: #{tpu_custom_call.1} parent=1 // pred_check
      _
    $region47: #{tpu_custom_call.1} parent=1 // pred_check_branch
      %116 = sbr.rel (0) target = $region49
    $region48: #{tpu_custom_call.1} parent=1 // pred_region
      %118 = dma.done [#allocation6], 6144
    $region49: #{tpu_custom_call.1} parent=1 // pred_fallthru
      _
    // Predicated region
    $region50: #{tpu_custom_call.1} parent=1 // pred_check
      _
    $region51: #{tpu_custom_call.1} parent=1 // pred_check_branch
      %120 = sbr.rel (0) target = $region53
    $region52: #{tpu_custom_call.1} parent=1 // pred_region
      %122 = dma.done [#allocation6], 48
    $region53: #{tpu_custom_call.1} parent=1 // pred_fallthru
      _
    // Predicated region
    $region54: #{tpu_custom_call.1} parent=1 // pred_check
      _
    $region55: #{tpu_custom_call.1} parent=1 // pred_check_branch
      %124 = sbr.rel (0) target = $region57
    $region56: #{tpu_custom_call.1} parent=1 // pred_region
      %126 = dma.done [#allocation9], 18432
    $region57: #{tpu_custom_call.1} parent=1 // pred_fallthru
      _
    // Predicated region
    $region58: #{tpu_custom_call.1} parent=1 // pred_check
      _
    $region59: #{tpu_custom_call.1} parent=1 // pred_check_branch
      %128 = sbr.rel (0) target = $region61
    $region60: #{tpu_custom_call.1} parent=1 // pred_region
      %130 = dma.done [#allocation9], 6144
    $region61: #{tpu_custom_call.1} parent=1 // pred_fallthru
      _
    // Predicated region
    $region62: #{tpu_custom_call.1} parent=1 // pred_check
      _
    $region63: #{tpu_custom_call.1} parent=1 // pred_check_branch
      %132 = sbr.rel (0) target = $region65
    $region64: #{tpu_custom_call.1} parent=1 // pred_region
      %134 = dma.done [#allocation12], 18432
    $region65: #{tpu_custom_call.1} parent=1 // pred_fallthru
      _
    // Predicated region
    $region66: #{tpu_custom_call.1} parent=1 // pred_check
      _
    $region67: #{tpu_custom_call.1} parent=1 // pred_check_branch
      %136 = sbr.rel (0) target = $region69
    $region68: #{tpu_custom_call.1} parent=1 // pred_region
      %138 = dma.done [#allocation12], 48
    $region69: #{tpu_custom_call.1} parent=1 // pred_fallthru
      _
    %v139 = vld [vmem:[#allocation2] sm:$0xff]
    %v140 = vld [vmem:[#allocation5] sm:$0xff]
    %v141 = vld [vmem:[#allocation5 + $0x8] sm:$0xff]
    %v142 = vld [vmem:[#allocation5 + $0x10] sm:$0xff]
    %v143 = vld [vmem:[#allocation5 + $0x18] sm:$0xff]
    %v144 = vld [vmem:[#allocation5 + $0x20] sm:$0xff]
    %v145 = vld [vmem:[#allocation5 + $0x28] sm:$0xff]
    %v146 = vld [vmem:[#allocation5 + $0x30] sm:$0xff]
    %v147 = vld [vmem:[#allocation5 + $0x38] sm:$0xff]
    %v148 = vld [vmem:[#allocation5 + $0x40] sm:$0xff]
    %v149 = vld [vmem:[#allocation5 + $0x48] sm:$0xff]
    %v150 = vld [vmem:[#allocation5 + $0x50] sm:$0xff]
    %v151 = vld [vmem:[#allocation5 + $0x58] sm:$0xff]
    %v152 = vld [vmem:[#allocation5 + $0x60] sm:$0xff]
    %v153 = vld [vmem:[#allocation5 + $0x68] sm:$0xff]
    %v154 = vld [vmem:[#allocation5 + $0x70] sm:$0xff]
    %v155 = vld [vmem:[#allocation5 + $0x78] sm:$0xff]
    %v156 = vld [vmem:[#allocation5 + $0x80] sm:$0xff]
    %v157 = vld [vmem:[#allocation5 + $0x88] sm:$0xff]
    %v158 = vld [vmem:[#allocation5 + $0x90] sm:$0xff]
    %v159 = vld [vmem:[#allocation5 + $0x98] sm:$0xff]
    %v160 = vld [vmem:[#allocation5 + $0xa0] sm:$0xff]
    %v161 = vld [vmem:[#allocation5 + $0xa8] sm:$0xff]
    %v162 = vld [vmem:[#allocation5 + $0xb0] sm:$0xff]
    %v163 = vld [vmem:[#allocation5 + $0xb8] sm:$0xff]
    %v164 = vld [vmem:[#allocation5 + $0xc0] sm:$0xff]
    %v165 = vld [vmem:[#allocation5 + $0xc8] sm:$0xff]
    %v166 = vld [vmem:[#allocation5 + $0xd0] sm:$0xff]
    %v167 = vld [vmem:[#allocation5 + $0xd8] sm:$0xff]
    %v168 = vld [vmem:[#allocation5 + $0xe0] sm:$0xff]
    %v169 = vld [vmem:[#allocation5 + $0xe8] sm:$0xff]
    %v170 = vld [vmem:[#allocation5 + $0xf0] sm:$0xff]
    %v171 = vld [vmem:[#allocation5 + $0xf8] sm:$0xff]
    %v172 = vld [vmem:[#allocation5 + $0x100] sm:$0xff]
    %v173 = vld [vmem:[#allocation5 + $0x108] sm:$0xff]
    %v174 = vld [vmem:[#allocation5 + $0x110] sm:$0xff]
    %v175 = vld [vmem:[#allocation5 + $0x118] sm:$0xff]
    %v176 = vld [vmem:[#allocation5 + $0x120] sm:$0xff]
    %v177 = vld [vmem:[#allocation5 + $0x128] sm:$0xff]
    %v178 = vld [vmem:[#allocation5 + $0x130] sm:$0xff]
    %v179 = vld [vmem:[#allocation5 + $0x138] sm:$0xff]
    %v180 = vld [vmem:[#allocation5 + $0x140] sm:$0xff]
    %v181 = vld [vmem:[#allocation5 + $0x148] sm:$0xff]
    %v182 = vld [vmem:[#allocation5 + $0x150] sm:$0xff]
    %v183 = vld [vmem:[#allocation5 + $0x158] sm:$0xff]
    %v184 = vld [vmem:[#allocation5 + $0x160] sm:$0xff]
    %v185 = vld [vmem:[#allocation5 + $0x168] sm:$0xff]
    %v186 = vld [vmem:[#allocation5 + $0x170] sm:$0xff]
    %v187 = vld [vmem:[#allocation5 + $0x178] sm:$0xff]
    %v188 = vld [vmem:[#allocation7] sm:$0x7]
    %v190 = vperm.slane %v188, 0
    %v191 = vperm.slane %v188, 1
    %v192 = vperm.slane %v188, 2
    %196 = vmatpush.msra.mxu0 %v185
    %197 = vmatpush.msra.mxu0 %v182
    %198 = vmatpush.msra.mxu0 %v179
    %199 = vmatpush.msra.mxu0 %v176
    %200 = vmatpush.msra.mxu0 %v173
    %201 = vmatpush.msra.mxu0 %v170
    %202 = vmatpush.msra.mxu0 %v167
    %203 = vmatpush.msra.mxu0 %v164
    %204 = vmatpush.msra.mxu0 %v161
    %205 = vmatpush.msra.mxu0 %v158
    %206 = vmatpush.msra.mxu0 %v155
    %207 = vmatpush.msra.mxu0 %v152
    %208 = vmatpush.msra.mxu0 %v149
    %209 = vmatpush.msra.mxu0 %v146
    %210 = vmatpush.msra.mxu0 %v143
    %211 = vmatpush.msra.mxu0 %v140
    %212 = vmatmul.f32.gmra.mxu0 %v139
    %v213 = vpop.f32.mrf.mxu0
    %v214 = vadd.f32 %v190, %v213
    %215 = vdwg.mxu0
    %216 = vmatpush.msra.mxu0 %v186
    %217 = vmatpush.msra.mxu0 %v183
    %218 = vmatpush.msra.mxu0 %v180
    %219 = vmatpush.msra.mxu0 %v177
    %220 = vmatpush.msra.mxu0 %v174
    %221 = vmatpush.msra.mxu0 %v171
    %222 = vmatpush.msra.mxu0 %v168
    %223 = vmatpush.msra.mxu0 %v165
    %224 = vmatpush.msra.mxu0 %v162
    %225 = vmatpush.msra.mxu0 %v159
    %226 = vmatpush.msra.mxu0 %v156
    %227 = vmatpush.msra.mxu0 %v153
    %228 = vmatpush.msra.mxu0 %v150
    %229 = vmatpush.msra.mxu0 %v147
    %230 = vmatpush.msra.mxu0 %v144
    %231 = vmatpush.msra.mxu0 %v141
    %232 = vmatmul.f32.gmra.mxu0 %v139
    %v233 = vpop.f32.mrf.mxu0
    %v234 = vadd.f32 %v191, %v233
    %235 = vdwg.mxu0
    %236 = vmatpush.msra.mxu0 %v187
    %237 = vmatpush.msra.mxu0 %v184
    %238 = vmatpush.msra.mxu0 %v181
    %239 = vmatpush.msra.mxu0 %v178
    %240 = vmatpush.msra.mxu0 %v175
    %241 = vmatpush.msra.mxu0 %v172
    %242 = vmatpush.msra.mxu0 %v169
    %243 = vmatpush.msra.mxu0 %v166
    %244 = vmatpush.msra.mxu0 %v163
    %245 = vmatpush.msra.mxu0 %v160
    %246 = vmatpush.msra.mxu0 %v157
    %247 = vmatpush.msra.mxu0 %v154
    %248 = vmatpush.msra.mxu0 %v151
    %249 = vmatpush.msra.mxu0 %v148
    %250 = vmatpush.msra.mxu0 %v145
    %251 = vmatpush.msra.mxu0 %v142
    %252 = vmatmul.f32.gmra.mxu0 %v139
    %v253 = vpop.f32.mrf.mxu0
    %v254 = vadd.f32 %v192, %v253
    %255 = vdwg.mxu0
    %v256 = vmax.f32 %v214, 0.0
    %v257 = vmax.f32 %v234, 0.0
    %v258 = vmax.f32 %v254, 0.0
    %v259 = vld [vmem:[#allocation8] sm:$0xff]
    %v260 = vld [vmem:[#allocation8 + $0x8] sm:$0xff]
    %v261 = vld [vmem:[#allocation8 + $0x10] sm:$0xff]
    %v262 = vld [vmem:[#allocation8 + $0x18] sm:$0xff]
    %v263 = vld [vmem:[#allocation8 + $0x20] sm:$0xff]
    %v264 = vld [vmem:[#allocation8 + $0x28] sm:$0xff]
    %v265 = vld [vmem:[#allocation8 + $0x30] sm:$0xff]
    %v266 = vld [vmem:[#allocation8 + $0x38] sm:$0xff]
    %v267 = vld [vmem:[#allocation8 + $0x40] sm:$0xff]
    %v268 = vld [vmem:[#allocation8 + $0x48] sm:$0xff]
    %v269 = vld [vmem:[#allocation8 + $0x50] sm:$0xff]
    %v270 = vld [vmem:[#allocation8 + $0x58] sm:$0xff]
    %v271 = vld [vmem:[#allocation8 + $0x60] sm:$0xff]
    %v272 = vld [vmem:[#allocation8 + $0x68] sm:$0xff]
    %v273 = vld [vmem:[#allocation8 + $0x70] sm:$0xff]
    %v274 = vld [vmem:[#allocation8 + $0x78] sm:$0xff]
    %v275 = vld [vmem:[#allocation8 + $0x80] sm:$0xff]
    %v276 = vld [vmem:[#allocation8 + $0x88] sm:$0xff]
    %v277 = vld [vmem:[#allocation8 + $0x90] sm:$0xff]
    %v278 = vld [vmem:[#allocation8 + $0x98] sm:$0xff]
    %v279 = vld [vmem:[#allocation8 + $0xa0] sm:$0xff]
    %v280 = vld [vmem:[#allocation8 + $0xa8] sm:$0xff]
    %v281 = vld [vmem:[#allocation8 + $0xb0] sm:$0xff]
    %v282 = vld [vmem:[#allocation8 + $0xb8] sm:$0xff]
    %v283 = vld [vmem:[#allocation8 + $0xc0] sm:$0xff]
    %v284 = vld [vmem:[#allocation8 + $0xc8] sm:$0xff]
    %v285 = vld [vmem:[#allocation8 + $0xd0] sm:$0xff]
    %v286 = vld [vmem:[#allocation8 + $0xd8] sm:$0xff]
    %v287 = vld [vmem:[#allocation8 + $0xe0] sm:$0xff]
    %v288 = vld [vmem:[#allocation8 + $0xe8] sm:$0xff]
    %v289 = vld [vmem:[#allocation8 + $0xf0] sm:$0xff]
    %v290 = vld [vmem:[#allocation8 + $0xf8] sm:$0xff]
    %v291 = vld [vmem:[#allocation8 + $0x100] sm:$0xff]
    %v292 = vld [vmem:[#allocation8 + $0x108] sm:$0xff]
    %v293 = vld [vmem:[#allocation8 + $0x110] sm:$0xff]
    %v294 = vld [vmem:[#allocation8 + $0x118] sm:$0xff]
    %v295 = vld [vmem:[#allocation8 + $0x120] sm:$0xff]
    %v296 = vld [vmem:[#allocation8 + $0x128] sm:$0xff]
    %v297 = vld [vmem:[#allocation8 + $0x130] sm:$0xff]
    %v298 = vld [vmem:[#allocation8 + $0x138] sm:$0xff]
    %v299 = vld [vmem:[#allocation8 + $0x140] sm:$0xff]
    %v300 = vld [vmem:[#allocation8 + $0x148] sm:$0xff]
    %v301 = vld [vmem:[#allocation8 + $0x150] sm:$0xff]
    %v302 = vld [vmem:[#allocation8 + $0x158] sm:$0xff]
    %v303 = vld [vmem:[#allocation8 + $0x160] sm:$0xff]
    %v304 = vld [vmem:[#allocation8 + $0x168] sm:$0xff]
    %v305 = vld [vmem:[#allocation8 + $0x170] sm:$0xff]
    %v306 = vld [vmem:[#allocation8 + $0x178] sm:$0xff]
    %v307 = vld [vmem:[#allocation8 + $0x180] sm:$0xff]
    %v308 = vld [vmem:[#allocation8 + $0x188] sm:$0xff]
    %v309 = vld [vmem:[#allocation8 + $0x190] sm:$0xff]
    %v310 = vld [vmem:[#allocation8 + $0x198] sm:$0xff]
    %v311 = vld [vmem:[#allocation8 + $0x1a0] sm:$0xff]
    %v312 = vld [vmem:[#allocation8 + $0x1a8] sm:$0xff]
    %v313 = vld [vmem:[#allocation8 + $0x1b0] sm:$0xff]
    %v314 = vld [vmem:[#allocation8 + $0x1b8] sm:$0xff]
    %v315 = vld [vmem:[#allocation8 + $0x1c0] sm:$0xff]
    %v316 = vld [vmem:[#allocation8 + $0x1c8] sm:$0xff]
    %v317 = vld [vmem:[#allocation8 + $0x1d0] sm:$0xff]
    %v318 = vld [vmem:[#allocation8 + $0x1d8] sm:$0xff]
    %v319 = vld [vmem:[#allocation8 + $0x1e0] sm:$0xff]
    %v320 = vld [vmem:[#allocation8 + $0x1e8] sm:$0xff]
    %v321 = vld [vmem:[#allocation8 + $0x1f0] sm:$0xff]
    %v322 = vld [vmem:[#allocation8 + $0x1f8] sm:$0xff]
    %v323 = vld [vmem:[#allocation8 + $0x200] sm:$0xff]
    %v324 = vld [vmem:[#allocation8 + $0x208] sm:$0xff]
    %v325 = vld [vmem:[#allocation8 + $0x210] sm:$0xff]
    %v326 = vld [vmem:[#allocation8 + $0x218] sm:$0xff]
    %v327 = vld [vmem:[#allocation8 + $0x220] sm:$0xff]
    %v328 = vld [vmem:[#allocation8 + $0x228] sm:$0xff]
    %v329 = vld [vmem:[#allocation8 + $0x230] sm:$0xff]
    %v330 = vld [vmem:[#allocation8 + $0x238] sm:$0xff]
    %v331 = vld [vmem:[#allocation8 + $0x240] sm:$0xff]
    %v332 = vld [vmem:[#allocation8 + $0x248] sm:$0xff]
    %v333 = vld [vmem:[#allocation8 + $0x250] sm:$0xff]
    %v334 = vld [vmem:[#allocation8 + $0x258] sm:$0xff]
    %v335 = vld [vmem:[#allocation8 + $0x260] sm:$0xff]
    %v336 = vld [vmem:[#allocation8 + $0x268] sm:$0xff]
    %v337 = vld [vmem:[#allocation8 + $0x270] sm:$0xff]
    %v338 = vld [vmem:[#allocation8 + $0x278] sm:$0xff]
    %v339 = vld [vmem:[#allocation8 + $0x280] sm:$0xff]
    %v340 = vld [vmem:[#allocation8 + $0x288] sm:$0xff]
    %v341 = vld [vmem:[#allocation8 + $0x290] sm:$0xff]
    %v342 = vld [vmem:[#allocation8 + $0x298] sm:$0xff]
    %v343 = vld [vmem:[#allocation8 + $0x2a0] sm:$0xff]
    %v344 = vld [vmem:[#allocation8 + $0x2a8] sm:$0xff]
    %v345 = vld [vmem:[#allocation8 + $0x2b0] sm:$0xff]
    %v346 = vld [vmem:[#allocation8 + $0x2b8] sm:$0xff]
    %v347 = vld [vmem:[#allocation8 + $0x2c0] sm:$0xff]
    %v348 = vld [vmem:[#allocation8 + $0x2c8] sm:$0xff]
    %v349 = vld [vmem:[#allocation8 + $0x2d0] sm:$0xff]
    %v350 = vld [vmem:[#allocation8 + $0x2d8] sm:$0xff]
    %v351 = vld [vmem:[#allocation8 + $0x2e0] sm:$0xff]
    %v352 = vld [vmem:[#allocation8 + $0x2e8] sm:$0xff]
    %v353 = vld [vmem:[#allocation8 + $0x2f0] sm:$0xff]
    %v354 = vld [vmem:[#allocation8 + $0x2f8] sm:$0xff]
    %v355 = vld [vmem:[#allocation8 + $0x300] sm:$0xff]
    %v356 = vld [vmem:[#allocation8 + $0x308] sm:$0xff]
    %v357 = vld [vmem:[#allocation8 + $0x310] sm:$0xff]
    %v358 = vld [vmem:[#allocation8 + $0x318] sm:$0xff]
    %v359 = vld [vmem:[#allocation8 + $0x320] sm:$0xff]
    %v360 = vld [vmem:[#allocation8 + $0x328] sm:$0xff]
    %v361 = vld [vmem:[#allocation8 + $0x330] sm:$0xff]
    %v362 = vld [vmem:[#allocation8 + $0x338] sm:$0xff]
    %v363 = vld [vmem:[#allocation8 + $0x340] sm:$0xff]
    %v364 = vld [vmem:[#allocation8 + $0x348] sm:$0xff]
    %v365 = vld [vmem:[#allocation8 + $0x350] sm:$0xff]
    %v366 = vld [vmem:[#allocation8 + $0x358] sm:$0xff]
    %v367 = vld [vmem:[#allocation8 + $0x360] sm:$0xff]
    %v368 = vld [vmem:[#allocation8 + $0x368] sm:$0xff]
    %v369 = vld [vmem:[#allocation8 + $0x370] sm:$0xff]
    %v370 = vld [vmem:[#allocation8 + $0x378] sm:$0xff]
    %v371 = vld [vmem:[#allocation8 + $0x380] sm:$0xff]
    %v372 = vld [vmem:[#allocation8 + $0x388] sm:$0xff]
    %v373 = vld [vmem:[#allocation8 + $0x390] sm:$0xff]
    %v374 = vld [vmem:[#allocation8 + $0x398] sm:$0xff]
    %v375 = vld [vmem:[#allocation8 + $0x3a0] sm:$0xff]
    %v376 = vld [vmem:[#allocation8 + $0x3a8] sm:$0xff]
    %v377 = vld [vmem:[#allocation8 + $0x3b0] sm:$0xff]
    %v378 = vld [vmem:[#allocation8 + $0x3b8] sm:$0xff]
    %v379 = vld [vmem:[#allocation8 + $0x3c0] sm:$0xff]
    %v380 = vld [vmem:[#allocation8 + $0x3c8] sm:$0xff]
    %v381 = vld [vmem:[#allocation8 + $0x3d0] sm:$0xff]
    %v382 = vld [vmem:[#allocation8 + $0x3d8] sm:$0xff]
    %v383 = vld [vmem:[#allocation8 + $0x3e0] sm:$0xff]
    %v384 = vld [vmem:[#allocation8 + $0x3e8] sm:$0xff]
    %v385 = vld [vmem:[#allocation8 + $0x3f0] sm:$0xff]
    %v386 = vld [vmem:[#allocation8 + $0x3f8] sm:$0xff]
    %v387 = vld [vmem:[#allocation8 + $0x400] sm:$0xff]
    %v388 = vld [vmem:[#allocation8 + $0x408] sm:$0xff]
    %v389 = vld [vmem:[#allocation8 + $0x410] sm:$0xff]
    %v390 = vld [vmem:[#allocation8 + $0x418] sm:$0xff]
    %v391 = vld [vmem:[#allocation8 + $0x420] sm:$0xff]
    %v392 = vld [vmem:[#allocation8 + $0x428] sm:$0xff]
    %v393 = vld [vmem:[#allocation8 + $0x430] sm:$0xff]
    %v394 = vld [vmem:[#allocation8 + $0x438] sm:$0xff]
    %v395 = vld [vmem:[#allocation8 + $0x440] sm:$0xff]
    %v396 = vld [vmem:[#allocation8 + $0x448] sm:$0xff]
    %v397 = vld [vmem:[#allocation8 + $0x450] sm:$0xff]
    %v398 = vld [vmem:[#allocation8 + $0x458] sm:$0xff]
    %v399 = vld [vmem:[#allocation8 + $0x460] sm:$0xff]
    %v400 = vld [vmem:[#allocation8 + $0x468] sm:$0xff]
    %v401 = vld [vmem:[#allocation8 + $0x470] sm:$0xff]
    %v402 = vld [vmem:[#allocation8 + $0x478] sm:$0xff]
    %v403 = vld [vmem:[#allocation10] sm:$0xff]
    %v404 = vld [vmem:[#allocation10 + $0x8] sm:$0xff]
    %v405 = vld [vmem:[#allocation10 + $0x10] sm:$0xff]
    %v406 = vld [vmem:[#allocation10 + $0x18] sm:$0xff]
    %v407 = vld [vmem:[#allocation10 + $0x20] sm:$0xff]
    %v408 = vld [vmem:[#allocation10 + $0x28] sm:$0xff]
    %v409 = vld [vmem:[#allocation10 + $0x30] sm:$0xff]
    %v410 = vld [vmem:[#allocation10 + $0x38] sm:$0xff]
    %v411 = vld [vmem:[#allocation10 + $0x40] sm:$0xff]
    %v412 = vld [vmem:[#allocation10 + $0x48] sm:$0xff]
    %v413 = vld [vmem:[#allocation10 + $0x50] sm:$0xff]
    %v414 = vld [vmem:[#allocation10 + $0x58] sm:$0xff]
    %v415 = vld [vmem:[#allocation10 + $0x60] sm:$0xff]
    %v416 = vld [vmem:[#allocation10 + $0x68] sm:$0xff]
    %v417 = vld [vmem:[#allocation10 + $0x70] sm:$0xff]
    %v418 = vld [vmem:[#allocation10 + $0x78] sm:$0xff]
    %v419 = vld [vmem:[#allocation10 + $0x80] sm:$0xff]
    %v420 = vld [vmem:[#allocation10 + $0x88] sm:$0xff]
    %v421 = vld [vmem:[#allocation10 + $0x90] sm:$0xff]
    %v422 = vld [vmem:[#allocation10 + $0x98] sm:$0xff]
    %v423 = vld [vmem:[#allocation10 + $0xa0] sm:$0xff]
    %v424 = vld [vmem:[#allocation10 + $0xa8] sm:$0xff]
    %v425 = vld [vmem:[#allocation10 + $0xb0] sm:$0xff]
    %v426 = vld [vmem:[#allocation10 + $0xb8] sm:$0xff]
    %v427 = vld [vmem:[#allocation10 + $0xc0] sm:$0xff]
    %v428 = vld [vmem:[#allocation10 + $0xc8] sm:$0xff]
    %v429 = vld [vmem:[#allocation10 + $0xd0] sm:$0xff]
    %v430 = vld [vmem:[#allocation10 + $0xd8] sm:$0xff]
    %v431 = vld [vmem:[#allocation10 + $0xe0] sm:$0xff]
    %v432 = vld [vmem:[#allocation10 + $0xe8] sm:$0xff]
    %v433 = vld [vmem:[#allocation10 + $0xf0] sm:$0xff]
    %v434 = vld [vmem:[#allocation10 + $0xf8] sm:$0xff]
    %v435 = vld [vmem:[#allocation10 + $0x100] sm:$0xff]
    %v436 = vld [vmem:[#allocation10 + $0x108] sm:$0xff]
    %v437 = vld [vmem:[#allocation10 + $0x110] sm:$0xff]
    %v438 = vld [vmem:[#allocation10 + $0x118] sm:$0xff]
    %v439 = vld [vmem:[#allocation10 + $0x120] sm:$0xff]
    %v440 = vld [vmem:[#allocation10 + $0x128] sm:$0xff]
    %v441 = vld [vmem:[#allocation10 + $0x130] sm:$0xff]
    %v442 = vld [vmem:[#allocation10 + $0x138] sm:$0xff]
    %v443 = vld [vmem:[#allocation10 + $0x140] sm:$0xff]
    %v444 = vld [vmem:[#allocation10 + $0x148] sm:$0xff]
    %v445 = vld [vmem:[#allocation10 + $0x150] sm:$0xff]
    %v446 = vld [vmem:[#allocation10 + $0x158] sm:$0xff]
    %v447 = vld [vmem:[#allocation10 + $0x160] sm:$0xff]
    %v448 = vld [vmem:[#allocation10 + $0x168] sm:$0xff]
    %v449 = vld [vmem:[#allocation10 + $0x170] sm:$0xff]
    %v450 = vld [vmem:[#allocation10 + $0x178] sm:$0xff]
    %451 = vmatpush.msra.mxu0 %v448
    %452 = vmatpush.msra.mxu0 %v445
    %453 = vmatpush.msra.mxu0 %v442
    %454 = vmatpush.msra.mxu0 %v439
    %455 = vmatpush.msra.mxu0 %v436
    %456 = vmatpush.msra.mxu0 %v433
    %457 = vmatpush.msra.mxu0 %v430
    %458 = vmatpush.msra.mxu0 %v427
    %459 = vmatpush.msra.mxu0 %v424
    %460 = vmatpush.msra.mxu0 %v421
    %461 = vmatpush.msra.mxu0 %v418
    %462 = vmatpush.msra.mxu0 %v415
    %463 = vmatpush.msra.mxu0 %v412
    %464 = vmatpush.msra.mxu0 %v409
    %465 = vmatpush.msra.mxu0 %v406
    %466 = vmatpush.msra.mxu0 %v403
    %467 = vmatmul.f32.gmra.mxu0 %v139
    %v468 = vpop.f32.mrf.mxu0
    %v469 = vadd.f32 0.0, %v468
    %470 = vdwg.mxu0
    %471 = vmatpush.msra.mxu0 %v449
    %472 = vmatpush.msra.mxu0 %v446
    %473 = vmatpush.msra.mxu0 %v443
    %474 = vmatpush.msra.mxu0 %v440
    %475 = vmatpush.msra.mxu0 %v437
    %476 = vmatpush.msra.mxu0 %v434
    %477 = vmatpush.msra.mxu0 %v431
    %478 = vmatpush.msra.mxu0 %v428
    %479 = vmatpush.msra.mxu0 %v425
    %480 = vmatpush.msra.mxu0 %v422
    %481 = vmatpush.msra.mxu0 %v419
    %482 = vmatpush.msra.mxu0 %v416
    %483 = vmatpush.msra.mxu0 %v413
    %484 = vmatpush.msra.mxu0 %v410
    %485 = vmatpush.msra.mxu0 %v407
    %486 = vmatpush.msra.mxu0 %v404
    %487 = vmatmul.f32.gmra.mxu0 %v139
    %v488 = vpop.f32.mrf.mxu0
    %v489 = vadd.f32 0.0, %v488
    %490 = vdwg.mxu0
    %491 = vmatpush.msra.mxu0 %v450
    %492 = vmatpush.msra.mxu0 %v447
    %493 = vmatpush.msra.mxu0 %v444
    %494 = vmatpush.msra.mxu0 %v441
    %495 = vmatpush.msra.mxu0 %v438
    %496 = vmatpush.msra.mxu0 %v435
    %497 = vmatpush.msra.mxu0 %v432
    %498 = vmatpush.msra.mxu0 %v429
    %499 = vmatpush.msra.mxu0 %v426
    %500 = vmatpush.msra.mxu0 %v423
    %501 = vmatpush.msra.mxu0 %v420
    %502 = vmatpush.msra.mxu0 %v417
    %503 = vmatpush.msra.mxu0 %v414
    %504 = vmatpush.msra.mxu0 %v411
    %505 = vmatpush.msra.mxu0 %v408
    %506 = vmatpush.msra.mxu0 %v405
    %507 = vmatmul.f32.gmra.mxu0 %v139
    %v508 = vpop.f32.mrf.mxu0
    %v509 = vadd.f32 0.0, %v508
    %510 = vdwg.mxu0
    %511 = vmatpush.msra.mxu0 %v304
    %512 = vmatpush.msra.mxu0 %v301
    %513 = vmatpush.msra.mxu0 %v298
    %514 = vmatpush.msra.mxu0 %v295
    %515 = vmatpush.msra.mxu0 %v292
    %516 = vmatpush.msra.mxu0 %v289
    %517 = vmatpush.msra.mxu0 %v286
    %518 = vmatpush.msra.mxu0 %v283
    %519 = vmatpush.msra.mxu0 %v280
    %520 = vmatpush.msra.mxu0 %v277
    %521 = vmatpush.msra.mxu0 %v274
    %522 = vmatpush.msra.mxu0 %v271
    %523 = vmatpush.msra.mxu0 %v268
    %524 = vmatpush.msra.mxu0 %v265
    %525 = vmatpush.msra.mxu0 %v262
    %526 = vmatpush.msra.mxu0 %v259
    %527 = vmatmul.f32.gmra.mxu0 %v256
    %v528 = vpop.f32.mrf.mxu0
    %v529 = vadd.f32 %v469, %v528
    %530 = vdwg.mxu0
    %531 = vmatpush.msra.mxu0 %v352
    %532 = vmatpush.msra.mxu0 %v349
    %533 = vmatpush.msra.mxu0 %v346
    %534 = vmatpush.msra.mxu0 %v343
    %535 = vmatpush.msra.mxu0 %v340
    %536 = vmatpush.msra.mxu0 %v337
    %537 = vmatpush.msra.mxu0 %v334
    %538 = vmatpush.msra.mxu0 %v331
    %539 = vmatpush.msra.mxu0 %v328
    %540 = vmatpush.msra.mxu0 %v325
    %541 = vmatpush.msra.mxu0 %v322
    %542 = vmatpush.msra.mxu0 %v319
    %543 = vmatpush.msra.mxu0 %v316
    %544 = vmatpush.msra.mxu0 %v313
    %545 = vmatpush.msra.mxu0 %v310
    %546 = vmatpush.msra.mxu0 %v307
    %547 = vmatmul.f32.gmra.mxu0 %v257
    %v548 = vpop.f32.mrf.mxu0
    %v549 = vadd.f32 %v529, %v548
    %550 = vdwg.mxu0
    %551 = vmatpush.msra.mxu0 %v400
    %552 = vmatpush.msra.mxu0 %v397
    %553 = vmatpush.msra.mxu0 %v394
    %554 = vmatpush.msra.mxu0 %v391
    %555 = vmatpush.msra.mxu0 %v388
    %556 = vmatpush.msra.mxu0 %v385
    %557 = vmatpush.msra.mxu0 %v382
    %558 = vmatpush.msra.mxu0 %v379
    %559 = vmatpush.msra.mxu0 %v376
    %560 = vmatpush.msra.mxu0 %v373
    %561 = vmatpush.msra.mxu0 %v370
    %562 = vmatpush.msra.mxu0 %v367
    %563 = vmatpush.msra.mxu0 %v364
    %564 = vmatpush.msra.mxu0 %v361
    %565 = vmatpush.msra.mxu0 %v358
    %566 = vmatpush.msra.mxu0 %v355
    %567 = vmatmul.f32.gmra.mxu0 %v258
    %v568 = vpop.f32.mrf.mxu0
    %v569 = vadd.f32 %v549, %v568
    %570 = vdwg.mxu0
    %571 = vmatpush.msra.mxu0 %v305
    %572 = vmatpush.msra.mxu0 %v302
    %573 = vmatpush.msra.mxu0 %v299
    %574 = vmatpush.msra.mxu0 %v296
    %575 = vmatpush.msra.mxu0 %v293
    %576 = vmatpush.msra.mxu0 %v290
    %577 = vmatpush.msra.mxu0 %v287
    %578 = vmatpush.msra.mxu0 %v284
    %579 = vmatpush.msra.mxu0 %v281
    %580 = vmatpush.msra.mxu0 %v278
    %581 = vmatpush.msra.mxu0 %v275
    %582 = vmatpush.msra.mxu0 %v272
    %583 = vmatpush.msra.mxu0 %v269
    %584 = vmatpush.msra.mxu0 %v266
    %585 = vmatpush.msra.mxu0 %v263
    %586 = vmatpush.msra.mxu0 %v260
    %587 = vmatmul.f32.gmra.mxu0 %v256
    %v588 = vpop.f32.mrf.mxu0
    %v589 = vadd.f32 %v489, %v588
    %590 = vdwg.mxu0
    %591 = vmatpush.msra.mxu0 %v353
    %592 = vmatpush.msra.mxu0 %v350
    %593 = vmatpush.msra.mxu0 %v347
    %594 = vmatpush.msra.mxu0 %v344
    %595 = vmatpush.msra.mxu0 %v341
    %596 = vmatpush.msra.mxu0 %v338
    %597 = vmatpush.msra.mxu0 %v335
    %598 = vmatpush.msra.mxu0 %v332
    %599 = vmatpush.msra.mxu0 %v329
    %600 = vmatpush.msra.mxu0 %v326
    %601 = vmatpush.msra.mxu0 %v323
    %602 = vmatpush.msra.mxu0 %v320
    %603 = vmatpush.msra.mxu0 %v317
    %604 = vmatpush.msra.mxu0 %v314
    %605 = vmatpush.msra.mxu0 %v311
    %606 = vmatpush.msra.mxu0 %v308
    %607 = vmatmul.f32.gmra.mxu0 %v257
    %v608 = vpop.f32.mrf.mxu0
    %v609 = vadd.f32 %v589, %v608
    %610 = vdwg.mxu0
    %611 = vmatpush.msra.mxu0 %v401
    %612 = vmatpush.msra.mxu0 %v398
    %613 = vmatpush.msra.mxu0 %v395
    %614 = vmatpush.msra.mxu0 %v392
    %615 = vmatpush.msra.mxu0 %v389
    %616 = vmatpush.msra.mxu0 %v386
    %617 = vmatpush.msra.mxu0 %v383
    %618 = vmatpush.msra.mxu0 %v380
    %619 = vmatpush.msra.mxu0 %v377
    %620 = vmatpush.msra.mxu0 %v374
    %621 = vmatpush.msra.mxu0 %v371
    %622 = vmatpush.msra.mxu0 %v368
    %623 = vmatpush.msra.mxu0 %v365
    %624 = vmatpush.msra.mxu0 %v362
    %625 = vmatpush.msra.mxu0 %v359
    %626 = vmatpush.msra.mxu0 %v356
    %627 = vmatmul.f32.gmra.mxu0 %v258
    %v628 = vpop.f32.mrf.mxu0
    %v629 = vadd.f32 %v609, %v628
    %630 = vdwg.mxu0
    %631 = vmatpush.msra.mxu0 %v306
    %632 = vmatpush.msra.mxu0 %v303
    %633 = vmatpush.msra.mxu0 %v300
    %634 = vmatpush.msra.mxu0 %v297
    %635 = vmatpush.msra.mxu0 %v294
    %636 = vmatpush.msra.mxu0 %v291
    %637 = vmatpush.msra.mxu0 %v288
    %638 = vmatpush.msra.mxu0 %v285
    %639 = vmatpush.msra.mxu0 %v282
    %640 = vmatpush.msra.mxu0 %v279
    %641 = vmatpush.msra.mxu0 %v276
    %642 = vmatpush.msra.mxu0 %v273
    %643 = vmatpush.msra.mxu0 %v270
    %644 = vmatpush.msra.mxu0 %v267
    %645 = vmatpush.msra.mxu0 %v264
    %646 = vmatpush.msra.mxu0 %v261
    %647 = vmatmul.f32.gmra.mxu0 %v256
    %v648 = vpop.f32.mrf.mxu0
    %v649 = vadd.f32 %v509, %v648
    %650 = vdwg.mxu0
    %651 = vmatpush.msra.mxu0 %v354
    %652 = vmatpush.msra.mxu0 %v351
    %653 = vmatpush.msra.mxu0 %v348
    %654 = vmatpush.msra.mxu0 %v345
    %655 = vmatpush.msra.mxu0 %v342
    %656 = vmatpush.msra.mxu0 %v339
    %657 = vmatpush.msra.mxu0 %v336
    %658 = vmatpush.msra.mxu0 %v333
    %659 = vmatpush.msra.mxu0 %v330
    %660 = vmatpush.msra.mxu0 %v327
    %661 = vmatpush.msra.mxu0 %v324
    %662 = vmatpush.msra.mxu0 %v321
    %663 = vmatpush.msra.mxu0 %v318
    %664 = vmatpush.msra.mxu0 %v315
    %665 = vmatpush.msra.mxu0 %v312
    %666 = vmatpush.msra.mxu0 %v309
    %667 = vmatmul.f32.gmra.mxu0 %v257
    %v668 = vpop.f32.mrf.mxu0
    %v669 = vadd.f32 %v649, %v668
    %670 = vdwg.mxu0
    %671 = vmatpush.msra.mxu0 %v402
    %672 = vmatpush.msra.mxu0 %v399
    %673 = vmatpush.msra.mxu0 %v396
    %674 = vmatpush.msra.mxu0 %v393
    %675 = vmatpush.msra.mxu0 %v390
    %676 = vmatpush.msra.mxu0 %v387
    %677 = vmatpush.msra.mxu0 %v384
    %678 = vmatpush.msra.mxu0 %v381
    %679 = vmatpush.msra.mxu0 %v378
    %680 = vmatpush.msra.mxu0 %v375
    %681 = vmatpush.msra.mxu0 %v372
    %682 = vmatpush.msra.mxu0 %v369
    %683 = vmatpush.msra.mxu0 %v366
    %684 = vmatpush.msra.mxu0 %v363
    %685 = vmatpush.msra.mxu0 %v360
    %686 = vmatpush.msra.mxu0 %v357
    %687 = vmatmul.f32.gmra.mxu0 %v258
    %v688 = vpop.f32.mrf.mxu0
    %v689 = vadd.f32 %v669, %v688
    %690 = vdwg.mxu0
    %v691 = vld [vmem:[%s5] sm:$0x7]
    %v693 = vperm.slane %v691, 0
    %v694 = vperm.slane %v691, 1
    %v695 = vperm.slane %v691, 2
    %v699 = vadd.f32 %v569, %v693
    %v700 = vadd.f32 %v629, %v694
    %v701 = vadd.f32 %v689, %v695
    %v702 = vmax.f32 %v699, 0.0
    %v703 = vmax.f32 %v700, 0.0
    %v704 = vmax.f32 %v701, 0.0
    %v705 = vld [vmem:[#allocation11] sm:$0xff]
    %v706 = vld [vmem:[#allocation11 + $0x8] sm:$0xff]
    %v707 = vld [vmem:[#allocation11 + $0x10] sm:$0xff]
    %v708 = vld [vmem:[#allocation11 + $0x18] sm:$0xff]
    %v709 = vld [vmem:[#allocation11 + $0x20] sm:$0xff]
    %v710 = vld [vmem:[#allocation11 + $0x28] sm:$0xff]
    %v711 = vld [vmem:[#allocation11 + $0x30] sm:$0xff]
    %v712 = vld [vmem:[#allocation11 + $0x38] sm:$0xff]
    %v713 = vld [vmem:[#allocation11 + $0x40] sm:$0xff]
    %v714 = vld [vmem:[#allocation11 + $0x48] sm:$0xff]
    %v715 = vld [vmem:[#allocation11 + $0x50] sm:$0xff]
    %v716 = vld [vmem:[#allocation11 + $0x58] sm:$0xff]
    %v717 = vld [vmem:[#allocation11 + $0x60] sm:$0xff]
    %v718 = vld [vmem:[#allocation11 + $0x68] sm:$0xff]
    %v719 = vld [vmem:[#allocation11 + $0x70] sm:$0xff]
    %v720 = vld [vmem:[#allocation11 + $0x78] sm:$0xff]
    %v721 = vld [vmem:[#allocation11 + $0x80] sm:$0xff]
    %v722 = vld [vmem:[#allocation11 + $0x88] sm:$0xff]
    %v723 = vld [vmem:[#allocation11 + $0x90] sm:$0xff]
    %v724 = vld [vmem:[#allocation11 + $0x98] sm:$0xff]
    %v725 = vld [vmem:[#allocation11 + $0xa0] sm:$0xff]
    %v726 = vld [vmem:[#allocation11 + $0xa8] sm:$0xff]
    %v727 = vld [vmem:[#allocation11 + $0xb0] sm:$0xff]
    %v728 = vld [vmem:[#allocation11 + $0xb8] sm:$0xff]
    %v729 = vld [vmem:[#allocation11 + $0xc0] sm:$0xff]
    %v730 = vld [vmem:[#allocation11 + $0xc8] sm:$0xff]
    %v731 = vld [vmem:[#allocation11 + $0xd0] sm:$0xff]
    %v732 = vld [vmem:[#allocation11 + $0xd8] sm:$0xff]
    %v733 = vld [vmem:[#allocation11 + $0xe0] sm:$0xff]
    %v734 = vld [vmem:[#allocation11 + $0xe8] sm:$0xff]
    %v735 = vld [vmem:[#allocation11 + $0xf0] sm:$0xff]
    %v736 = vld [vmem:[#allocation11 + $0xf8] sm:$0xff]
    %v737 = vld [vmem:[#allocation11 + $0x100] sm:$0xff]
    %v738 = vld [vmem:[#allocation11 + $0x108] sm:$0xff]
    %v739 = vld [vmem:[#allocation11 + $0x110] sm:$0xff]
    %v740 = vld [vmem:[#allocation11 + $0x118] sm:$0xff]
    %v741 = vld [vmem:[#allocation11 + $0x120] sm:$0xff]
    %v742 = vld [vmem:[#allocation11 + $0x128] sm:$0xff]
    %v743 = vld [vmem:[#allocation11 + $0x130] sm:$0xff]
    %v744 = vld [vmem:[#allocation11 + $0x138] sm:$0xff]
    %v745 = vld [vmem:[#allocation11 + $0x140] sm:$0xff]
    %v746 = vld [vmem:[#allocation11 + $0x148] sm:$0xff]
    %v747 = vld [vmem:[#allocation11 + $0x150] sm:$0xff]
    %v748 = vld [vmem:[#allocation11 + $0x158] sm:$0xff]
    %v749 = vld [vmem:[#allocation11 + $0x160] sm:$0xff]
    %v750 = vld [vmem:[#allocation11 + $0x168] sm:$0xff]
    %v751 = vld [vmem:[#allocation11 + $0x170] sm:$0xff]
    %v752 = vld [vmem:[#allocation11 + $0x178] sm:$0xff]
    %v753 = vld [vmem:[#allocation11 + $0x180] sm:$0xff]
    %v754 = vld [vmem:[#allocation11 + $0x188] sm:$0xff]
    %v755 = vld [vmem:[#allocation11 + $0x190] sm:$0xff]
    %v756 = vld [vmem:[#allocation11 + $0x198] sm:$0xff]
    %v757 = vld [vmem:[#allocation11 + $0x1a0] sm:$0xff]
    %v758 = vld [vmem:[#allocation11 + $0x1a8] sm:$0xff]
    %v759 = vld [vmem:[#allocation11 + $0x1b0] sm:$0xff]
    %v760 = vld [vmem:[#allocation11 + $0x1b8] sm:$0xff]
    %v761 = vld [vmem:[#allocation11 + $0x1c0] sm:$0xff]
    %v762 = vld [vmem:[#allocation11 + $0x1c8] sm:$0xff]
    %v763 = vld [vmem:[#allocation11 + $0x1d0] sm:$0xff]
    %v764 = vld [vmem:[#allocation11 + $0x1d8] sm:$0xff]
    %v765 = vld [vmem:[#allocation11 + $0x1e0] sm:$0xff]
    %v766 = vld [vmem:[#allocation11 + $0x1e8] sm:$0xff]
    %v767 = vld [vmem:[#allocation11 + $0x1f0] sm:$0xff]
    %v768 = vld [vmem:[#allocation11 + $0x1f8] sm:$0xff]
    %v769 = vld [vmem:[#allocation11 + $0x200] sm:$0xff]
    %v770 = vld [vmem:[#allocation11 + $0x208] sm:$0xff]
    %v771 = vld [vmem:[#allocation11 + $0x210] sm:$0xff]
    %v772 = vld [vmem:[#allocation11 + $0x218] sm:$0xff]
    %v773 = vld [vmem:[#allocation11 + $0x220] sm:$0xff]
    %v774 = vld [vmem:[#allocation11 + $0x228] sm:$0xff]
    %v775 = vld [vmem:[#allocation11 + $0x230] sm:$0xff]
    %v776 = vld [vmem:[#allocation11 + $0x238] sm:$0xff]
    %v777 = vld [vmem:[#allocation11 + $0x240] sm:$0xff]
    %v778 = vld [vmem:[#allocation11 + $0x248] sm:$0xff]
    %v779 = vld [vmem:[#allocation11 + $0x250] sm:$0xff]
    %v780 = vld [vmem:[#allocation11 + $0x258] sm:$0xff]
    %v781 = vld [vmem:[#allocation11 + $0x260] sm:$0xff]
    %v782 = vld [vmem:[#allocation11 + $0x268] sm:$0xff]
    %v783 = vld [vmem:[#allocation11 + $0x270] sm:$0xff]
    %v784 = vld [vmem:[#allocation11 + $0x278] sm:$0xff]
    %v785 = vld [vmem:[#allocation11 + $0x280] sm:$0xff]
    %v786 = vld [vmem:[#allocation11 + $0x288] sm:$0xff]
    %v787 = vld [vmem:[#allocation11 + $0x290] sm:$0xff]
    %v788 = vld [vmem:[#allocation11 + $0x298] sm:$0xff]
    %v789 = vld [vmem:[#allocation11 + $0x2a0] sm:$0xff]
    %v790 = vld [vmem:[#allocation11 + $0x2a8] sm:$0xff]
    %v791 = vld [vmem:[#allocation11 + $0x2b0] sm:$0xff]
    %v792 = vld [vmem:[#allocation11 + $0x2b8] sm:$0xff]
    %v793 = vld [vmem:[#allocation11 + $0x2c0] sm:$0xff]
    %v794 = vld [vmem:[#allocation11 + $0x2c8] sm:$0xff]
    %v795 = vld [vmem:[#allocation11 + $0x2d0] sm:$0xff]
    %v796 = vld [vmem:[#allocation11 + $0x2d8] sm:$0xff]
    %v797 = vld [vmem:[#allocation11 + $0x2e0] sm:$0xff]
    %v798 = vld [vmem:[#allocation11 + $0x2e8] sm:$0xff]
    %v799 = vld [vmem:[#allocation11 + $0x2f0] sm:$0xff]
    %v800 = vld [vmem:[#allocation11 + $0x2f8] sm:$0xff]
    %v801 = vld [vmem:[#allocation11 + $0x300] sm:$0xff]
    %v802 = vld [vmem:[#allocation11 + $0x308] sm:$0xff]
    %v803 = vld [vmem:[#allocation11 + $0x310] sm:$0xff]
    %v804 = vld [vmem:[#allocation11 + $0x318] sm:$0xff]
    %v805 = vld [vmem:[#allocation11 + $0x320] sm:$0xff]
    %v806 = vld [vmem:[#allocation11 + $0x328] sm:$0xff]
    %v807 = vld [vmem:[#allocation11 + $0x330] sm:$0xff]
    %v808 = vld [vmem:[#allocation11 + $0x338] sm:$0xff]
    %v809 = vld [vmem:[#allocation11 + $0x340] sm:$0xff]
    %v810 = vld [vmem:[#allocation11 + $0x348] sm:$0xff]
    %v811 = vld [vmem:[#allocation11 + $0x350] sm:$0xff]
    %v812 = vld [vmem:[#allocation11 + $0x358] sm:$0xff]
    %v813 = vld [vmem:[#allocation11 + $0x360] sm:$0xff]
    %v814 = vld [vmem:[#allocation11 + $0x368] sm:$0xff]
    %v815 = vld [vmem:[#allocation11 + $0x370] sm:$0xff]
    %v816 = vld [vmem:[#allocation11 + $0x378] sm:$0xff]
    %v817 = vld [vmem:[#allocation11 + $0x380] sm:$0xff]
    %v818 = vld [vmem:[#allocation11 + $0x388] sm:$0xff]
    %v819 = vld [vmem:[#allocation11 + $0x390] sm:$0xff]
    %v820 = vld [vmem:[#allocation11 + $0x398] sm:$0xff]
    %v821 = vld [vmem:[#allocation11 + $0x3a0] sm:$0xff]
    %v822 = vld [vmem:[#allocation11 + $0x3a8] sm:$0xff]
    %v823 = vld [vmem:[#allocation11 + $0x3b0] sm:$0xff]
    %v824 = vld [vmem:[#allocation11 + $0x3b8] sm:$0xff]
    %v825 = vld [vmem:[#allocation11 + $0x3c0] sm:$0xff]
    %v826 = vld [vmem:[#allocation11 + $0x3c8] sm:$0xff]
    %v827 = vld [vmem:[#allocation11 + $0x3d0] sm:$0xff]
    %v828 = vld [vmem:[#allocation11 + $0x3d8] sm:$0xff]
    %v829 = vld [vmem:[#allocation11 + $0x3e0] sm:$0xff]
    %v830 = vld [vmem:[#allocation11 + $0x3e8] sm:$0xff]
    %v831 = vld [vmem:[#allocation11 + $0x3f0] sm:$0xff]
    %v832 = vld [vmem:[#allocation11 + $0x3f8] sm:$0xff]
    %v833 = vld [vmem:[#allocation11 + $0x400] sm:$0xff]
    %v834 = vld [vmem:[#allocation11 + $0x408] sm:$0xff]
    %v835 = vld [vmem:[#allocation11 + $0x410] sm:$0xff]
    %v836 = vld [vmem:[#allocation11 + $0x418] sm:$0xff]
    %v837 = vld [vmem:[#allocation11 + $0x420] sm:$0xff]
    %v838 = vld [vmem:[#allocation11 + $0x428] sm:$0xff]
    %v839 = vld [vmem:[#allocation11 + $0x430] sm:$0xff]
    %v840 = vld [vmem:[#allocation11 + $0x438] sm:$0xff]
    %v841 = vld [vmem:[#allocation11 + $0x440] sm:$0xff]
    %v842 = vld [vmem:[#allocation11 + $0x448] sm:$0xff]
    %v843 = vld [vmem:[#allocation11 + $0x450] sm:$0xff]
    %v844 = vld [vmem:[#allocation11 + $0x458] sm:$0xff]
    %v845 = vld [vmem:[#allocation11 + $0x460] sm:$0xff]
    %v846 = vld [vmem:[#allocation11 + $0x468] sm:$0xff]
    %v847 = vld [vmem:[#allocation11 + $0x470] sm:$0xff]
    %v848 = vld [vmem:[#allocation11 + $0x478] sm:$0xff]
    %v849 = vld [vmem:[%s7] sm:$0x7]
    %v851 = vperm.slane %v849, 0
    %v852 = vperm.slane %v849, 1
    %v853 = vperm.slane %v849, 2
    %857 = vmatpush.msra.mxu0 %v750
    %858 = vmatpush.msra.mxu0 %v747
    %859 = vmatpush.msra.mxu0 %v744
    %860 = vmatpush.msra.mxu0 %v741
    %861 = vmatpush.msra.mxu0 %v738
    %862 = vmatpush.msra.mxu0 %v735
    %863 = vmatpush.msra.mxu0 %v732
    %864 = vmatpush.msra.mxu0 %v729
    %865 = vmatpush.msra.mxu0 %v726
    %866 = vmatpush.msra.mxu0 %v723
    %867 = vmatpush.msra.mxu0 %v720
    %868 = vmatpush.msra.mxu0 %v717
    %869 = vmatpush.msra.mxu0 %v714
    %870 = vmatpush.msra.mxu0 %v711
    %871 = vmatpush.msra.mxu0 %v708
    %872 = vmatpush.msra.mxu0 %v705
    %873 = vmatmul.f32.gmra.mxu0 %v702
    %v874 = vpop.f32.mrf.mxu0
    %v875 = vadd.f32 %v851, %v874
    %876 = vdwg.mxu0
    %877 = vmatpush.msra.mxu0 %v798
    %878 = vmatpush.msra.mxu0 %v795
    %879 = vmatpush.msra.mxu0 %v792
    %880 = vmatpush.msra.mxu0 %v789
    %881 = vmatpush.msra.mxu0 %v786
    %882 = vmatpush.msra.mxu0 %v783
    %883 = vmatpush.msra.mxu0 %v780
    %884 = vmatpush.msra.mxu0 %v777
    %885 = vmatpush.msra.mxu0 %v774
    %886 = vmatpush.msra.mxu0 %v771
    %887 = vmatpush.msra.mxu0 %v768
    %888 = vmatpush.msra.mxu0 %v765
    %889 = vmatpush.msra.mxu0 %v762
    %890 = vmatpush.msra.mxu0 %v759
    %891 = vmatpush.msra.mxu0 %v756
    %892 = vmatpush.msra.mxu0 %v753
    %893 = vmatmul.f32.gmra.mxu0 %v703
    %v894 = vpop.f32.mrf.mxu0
    %v895 = vadd.f32 %v875, %v894
    %896 = vdwg.mxu0
    %897 = vmatpush.msra.mxu0 %v846
    %898 = vmatpush.msra.mxu0 %v843
    %899 = vmatpush.msra.mxu0 %v840
    %900 = vmatpush.msra.mxu0 %v837
    %901 = vmatpush.msra.mxu0 %v834
    %902 = vmatpush.msra.mxu0 %v831
    %903 = vmatpush.msra.mxu0 %v828
    %904 = vmatpush.msra.mxu0 %v825
    %905 = vmatpush.msra.mxu0 %v822
    %906 = vmatpush.msra.mxu0 %v819
    %907 = vmatpush.msra.mxu0 %v816
    %908 = vmatpush.msra.mxu0 %v813
    %909 = vmatpush.msra.mxu0 %v810
    %910 = vmatpush.msra.mxu0 %v807
    %911 = vmatpush.msra.mxu0 %v804
    %912 = vmatpush.msra.mxu0 %v801
    %913 = vmatmul.f32.gmra.mxu0 %v704
    %v914 = vpop.f32.mrf.mxu0
    %v915 = vadd.f32 %v895, %v914
    %916 = vdwg.mxu0
    %917 = vmatpush.msra.mxu0 %v751
    %918 = vmatpush.msra.mxu0 %v748
    %919 = vmatpush.msra.mxu0 %v745
    %920 = vmatpush.msra.mxu0 %v742
    %921 = vmatpush.msra.mxu0 %v739
    %922 = vmatpush.msra.mxu0 %v736
    %923 = vmatpush.msra.mxu0 %v733
    %924 = vmatpush.msra.mxu0 %v730
    %925 = vmatpush.msra.mxu0 %v727
    %926 = vmatpush.msra.mxu0 %v724
    %927 = vmatpush.msra.mxu0 %v721
    %928 = vmatpush.msra.mxu0 %v718
    %929 = vmatpush.msra.mxu0 %v715
    %930 = vmatpush.msra.mxu0 %v712
    %931 = vmatpush.msra.mxu0 %v709
    %932 = vmatpush.msra.mxu0 %v706
    %933 = vmatmul.f32.gmra.mxu0 %v702
    %v934 = vpop.f32.mrf.mxu0
    %v935 = vadd.f32 %v852, %v934
    %936 = vdwg.mxu0
    %937 = vmatpush.msra.mxu0 %v799
    %938 = vmatpush.msra.mxu0 %v796
    %939 = vmatpush.msra.mxu0 %v793
    %940 = vmatpush.msra.mxu0 %v790
    %941 = vmatpush.msra.mxu0 %v787
    %942 = vmatpush.msra.mxu0 %v784
    %943 = vmatpush.msra.mxu0 %v781
    %944 = vmatpush.msra.mxu0 %v778
    %945 = vmatpush.msra.mxu0 %v775
    %946 = vmatpush.msra.mxu0 %v772
    %947 = vmatpush.msra.mxu0 %v769
    %948 = vmatpush.msra.mxu0 %v766
    %949 = vmatpush.msra.mxu0 %v763
    %950 = vmatpush.msra.mxu0 %v760
    %951 = vmatpush.msra.mxu0 %v757
    %952 = vmatpush.msra.mxu0 %v754
    %953 = vmatmul.f32.gmra.mxu0 %v703
    %v954 = vpop.f32.mrf.mxu0
    %v955 = vadd.f32 %v935, %v954
    %956 = vdwg.mxu0
    %957 = vmatpush.msra.mxu0 %v847
    %958 = vmatpush.msra.mxu0 %v844
    %959 = vmatpush.msra.mxu0 %v841
    %960 = vmatpush.msra.mxu0 %v838
    %961 = vmatpush.msra.mxu0 %v835
    %962 = vmatpush.msra.mxu0 %v832
    %963 = vmatpush.msra.mxu0 %v829
    %964 = vmatpush.msra.mxu0 %v826
    %965 = vmatpush.msra.mxu0 %v823
    %966 = vmatpush.msra.mxu0 %v820
    %967 = vmatpush.msra.mxu0 %v817
    %968 = vmatpush.msra.mxu0 %v814
    %969 = vmatpush.msra.mxu0 %v811
    %970 = vmatpush.msra.mxu0 %v808
    %971 = vmatpush.msra.mxu0 %v805
    %972 = vmatpush.msra.mxu0 %v802
    %973 = vmatmul.f32.gmra.mxu0 %v704
    %v974 = vpop.f32.mrf.mxu0
    %v975 = vadd.f32 %v955, %v974
    %976 = vdwg.mxu0
    %977 = vmatpush.msra.mxu0 %v752
    %978 = vmatpush.msra.mxu0 %v749
    %979 = vmatpush.msra.mxu0 %v746
    %980 = vmatpush.msra.mxu0 %v743
    %981 = vmatpush.msra.mxu0 %v740
    %982 = vmatpush.msra.mxu0 %v737
    %983 = vmatpush.msra.mxu0 %v734
    %984 = vmatpush.msra.mxu0 %v731
    %985 = vmatpush.msra.mxu0 %v728
    %986 = vmatpush.msra.mxu0 %v725
    %987 = vmatpush.msra.mxu0 %v722
    %988 = vmatpush.msra.mxu0 %v719
    %989 = vmatpush.msra.mxu0 %v716
    %990 = vmatpush.msra.mxu0 %v713
    %991 = vmatpush.msra.mxu0 %v710
    %992 = vmatpush.msra.mxu0 %v707
    %993 = vmatmul.f32.gmra.mxu0 %v702
    %v994 = vpop.f32.mrf.mxu0
    %v995 = vadd.f32 %v853, %v994
    %996 = vdwg.mxu0
    %997 = vmatpush.msra.mxu0 %v800
    %998 = vmatpush.msra.mxu0 %v797
    %999 = vmatpush.msra.mxu0 %v794
    %1000 = vmatpush.msra.mxu0 %v791
    %1001 = vmatpush.msra.mxu0 %v788
    %1002 = vmatpush.msra.mxu0 %v785
    %1003 = vmatpush.msra.mxu0 %v782
    %1004 = vmatpush.msra.mxu0 %v779
    %1005 = vmatpush.msra.mxu0 %v776
    %1006 = vmatpush.msra.mxu0 %v773
    %1007 = vmatpush.msra.mxu0 %v770
    %1008 = vmatpush.msra.mxu0 %v767
    %1009 = vmatpush.msra.mxu0 %v764
    %1010 = vmatpush.msra.mxu0 %v761
    %1011 = vmatpush.msra.mxu0 %v758
    %1012 = vmatpush.msra.mxu0 %v755
    %1013 = vmatmul.f32.gmra.mxu0 %v703
    %v1014 = vpop.f32.mrf.mxu0
    %v1015 = vadd.f32 %v995, %v1014
    %1016 = vdwg.mxu0
    %1017 = vmatpush.msra.mxu0 %v848
    %1018 = vmatpush.msra.mxu0 %v845
    %1019 = vmatpush.msra.mxu0 %v842
    %1020 = vmatpush.msra.mxu0 %v839
    %1021 = vmatpush.msra.mxu0 %v836
    %1022 = vmatpush.msra.mxu0 %v833
    %1023 = vmatpush.msra.mxu0 %v830
    %1024 = vmatpush.msra.mxu0 %v827
    %1025 = vmatpush.msra.mxu0 %v824
    %1026 = vmatpush.msra.mxu0 %v821
    %1027 = vmatpush.msra.mxu0 %v818
    %1028 = vmatpush.msra.mxu0 %v815
    %1029 = vmatpush.msra.mxu0 %v812
    %1030 = vmatpush.msra.mxu0 %v809
    %1031 = vmatpush.msra.mxu0 %v806
    %1032 = vmatpush.msra.mxu0 %v803
    %1033 = vmatmul.f32.gmra.mxu0 %v704
    %v1034 = vpop.f32.mrf.mxu0
    %v1035 = vadd.f32 %v1015, %v1034
    %1036 = vdwg.mxu0
    %v1037 = vmax.f32 %v915, 0.0
    %v1038 = vmax.f32 %v975, 0.0
    %v1039 = vmax.f32 %v1035, 0.0
    %v1040 = vld [vmem:[#allocation13] sm:$0x7]
    %v1042 = vperm.slane %v1040, 0
    %v1043 = vperm.slane %v1040, 1
    %v1044 = vperm.slane %v1040, 2
    %v1048 = vmul.f32 %v1037, %v1042
    %v1049 = vmul.f32 %v1038, %v1043
    %v1050 = vmul.f32 %v1039, %v1044
    %v1051 = vadd.f32 %v1048, %v1049
    %v1052 = vadd.f32 %v1051, %v1050
    %1053 = vadd.xlane.f32.xlu0 %v1052
    %v1054 = vpop.xlane.xlu0 %1053
    %v1055 = vld [vmem:[%s9] sm:$0x1]
    %v1057 = vperm.slane %v1055, 0
    %v1059 = vadd.f32 %v1054, %v1057
    %1060 = vst [vmem:[#allocation14] sm:$0xff] %v1059
    // Predicated region
    $region70: #{tpu_custom_call.1} parent=1 // pred_check
      _
    $region71: #{tpu_custom_call.1} parent=1 // pred_check_branch
      %1062 = sbr.rel (0) target = $region73
    $region72: #{tpu_custom_call.1} parent=1 // pred_region
      %1064 = vsyncadd [#allocation4], 0
      %s1066 = sshll.u32 [#allocation14], 4
      %s1067 = int_to_ptr.vmem [resolvable:$true] %s1066
      %s1068 = sshll.u32 %s10, 4
      %s1069 = int_to_ptr.hbm [resolvable:$true] %s1068
      %1071 = dma.vmem_to_hbm [thread:$0]  %s1067, 128, %s1069, [#allocation4]
    $region73: #{tpu_custom_call.1} parent=1 // pred_fallthru
      _
    // Predicated region
    $region74: #{tpu_custom_call.1} parent=1 // pred_check
      _
    $region75: #{tpu_custom_call.1} parent=1 // pred_check_branch
      %1073 = sbr.rel (0) target = $region77
    $region76: #{tpu_custom_call.1} parent=1 // pred_region
      %1075 = dma.done [#allocation4], 128
    $region77: #{tpu_custom_call.1} parent=1 // pred_fallthru
      _
    %1076 = vsyncpa [#allocation3], 1
    %1077 = vsyncpa [#allocation6], 1
    %1078 = vsyncpa [#allocation9], 1
    %1079 = vsyncpa [#allocation12], 1
    %1080 = vsyncpa [#allocation4], 1

</llo_original>
